<compile_context>
chip_gen: v7x
topology: tpu7x:2x2x1
jax: 0.10.0
libtpu: 0.0.40
codegen_flags: <defaults>
</compile_context>

<pallas_src>
import functools

import jax
import jax.numpy as jnp
from jax.experimental import pallas as pl
from jax.experimental.pallas import tpu as pltpu

LANE = 128
_CHUNK_ROWS = 256                       # rows per in-kernel softmax chunk
_TARGET_INPUT_BLOCK_BYTES = 5 * 1024 * 1024   # pred + target bytes per grid step


def _cdiv(a, b):
    return -(-a // b)


def _round_up(x, m):
    return _cdiv(x, m) * m


def _dice_sums_kernel(p_ref, t_ref, out_ref, *, labels_mode, block_rows,
                      chunk_rows, blocks_per_split, n_blocks_total, hw,
                      needs_mask):
    """One grid step over a (1, C, block_rows, 128) logits tile.

    p_ref   : (1, C, block_rows, LANE) logits block (any float dtype)
    t_ref   : (1, block_rows, LANE) int labels  if labels_mode
              (1, C, block_rows, LANE) one-hot   otherwise
    out_ref : (1, 1, 3, C, LANE) lane-wise partial sums, resident across the
              row-block ("arbitrary") grid axis:
                row 0: sum(softmax), row 1: sum(target), row 2: sum(prod)
    """
    s = pl.program_id(1)
    j = pl.program_id(2)
    g = s * blocks_per_split + j              # global row-block index

    @pl.when(j == 0)
    def _init():
        out_ref[...] = jnp.zeros(out_ref.shape, out_ref.dtype)

    C = p_ref.shape[1]

    def _accumulate(masked):
        acc_p = jnp.zeros((C, LANE), jnp.float32)
        acc_t = jnp.zeros((C, LANE), jnp.float32)
        acc_pt = jnp.zeros((C, LANE), jnp.float32)

        n_chunks = _cdiv(block_rows, chunk_rows)
        for ci in range(n_chunks):
            r0 = ci * chunk_rows
            rows = min(chunk_rows, block_rows - r0)

            logits = p_ref[0, :, r0:r0 + rows, :].astype(jnp.float32)  # (C,rows,LANE)

            valid = None
            if masked:
                row = jax.lax.broadcasted_iota(jnp.int32, (rows, LANE), 0)
                lane = jax.lax.broadcasted_iota(jnp.int32, (rows, LANE), 1)
                flat = (g * block_rows + r0 + row) * LANE + lane
                valid = flat < hw                                      # (rows,LANE)
                # Sanitize *before* the softmax so stale/NaN data in a partial
                # last block cannot propagate through exp / the denominator.
                logits = jnp.where(valid[None], logits, 0.0)

            # Numerically-stable softmax across the (leading, untiled) channel
            # axis: pure elementwise work over the C slabs (VPU) + exp (EUP).
            m = jnp.max(logits, axis=0, keepdims=True)                 # (1,rows,LANE)
            e = jnp.exp(logits - m)
            denom = jnp.sum(e, axis=0, keepdims=True)
            inv = pl.reciprocal(denom, approx=True)                    # EUP slot
            inv = inv * (2.0 - denom * inv)                            # Newton -> ~f32 exact
            sm = e * inv

            if labels_mode:
                lbl = t_ref[0, r0:r0 + rows, :].astype(jnp.int32)      # (rows,LANE)
                cidx = jax.lax.broadcasted_iota(jnp.int32, (C, rows, LANE), 0)
                eq = cidx == lbl[None]
                if masked:
                    eq = jnp.logical_and(eq, valid[None])
                tgt = eq.astype(jnp.float32)
            else:
                tgt = t_ref[0, :, r0:r0 + rows, :].astype(jnp.float32)
                if masked:
                    tgt = jnp.where(valid[None], tgt, 0.0)

            if masked:
                sm = jnp.where(valid[None], sm, 0.0)

            # Collapse only the row (sublane) axis; all 128 lanes stay live so
            # there is no cross-lane reduction in the steady state.
            acc_p = acc_p + jnp.sum(sm, axis=1)
            acc_t = acc_t + jnp.sum(tgt, axis=1)
            acc_pt = acc_pt + jnp.sum(sm * tgt, axis=1)

        out_ref[0, 0, 0] += acc_p
        out_ref[0, 0, 1] += acc_t
        out_ref[0, 0, 2] += acc_pt

    if needs_mask:
        @pl.when(g < n_blocks_total - 1)
        def _fast():
            _accumulate(False)

        @pl.when(g == n_blocks_total - 1)
        def _masked():
            _accumulate(True)
    else:
        _accumulate(False)


def _dice_channel_sums(pred, target, *, block_rows=None):
    """pred: (N, C, H, W); target: (N, C, H, W) one-hot or (N, H, W) labels.

    Returns (3, C) f32: [sum(softmax), sum(target), sum(softmax*target)] per channel.
    """
    N, C, H, W = pred.shape
    labels_mode = (target.ndim == pred.ndim - 1)
    hw = H * W

    p3 = pred.reshape(N, C, hw)
    t3 = target.reshape(N, hw) if labels_mode else target.reshape(N, C, hw)

    hw_pad = _round_up(hw, LANE)
    if hw_pad != hw:
        # TODO(synk): ragged H*W still takes one extra HBM pass for this pad; a
        # dedicated lane-major (C, pixels) kernel variant could avoid it.
        pad = hw_pad - hw
        p3 = jnp.pad(p3, ((0, 0), (0, 0), (0, pad)))
        t3 = jnp.pad(t3, ((0, 0), (0, pad)) if labels_mode
                     else ((0, 0), (0, 0), (0, pad)))
    n_rows = hw_pad // LANE

    p4 = p3.reshape(N, C, n_rows, LANE)
    t4 = t3.reshape(N, n_rows, LANE) if labels_mode else t3.reshape(N, C, n_rows, LANE)

    # ---- block sizing (upper-bounded by ~5 MiB of inputs per grid step) ----
    if block_rows is None:
        p_item = pred.dtype.itemsize
        t_item = 4 if labels_mode else target.dtype.itemsize
        row_bytes = C * LANE * p_item + (LANE * t_item if labels_mode
                                         else C * LANE * t_item)
        r_target = max(8, _TARGET_INPUT_BLOCK_BYTES // row_bytes)
        if r_target >= _CHUNK_ROWS:
            r_target = (r_target // _CHUNK_ROWS) * _CHUNK_ROWS
        else:
            r_target = max(8, (r_target // 8) * 8)
        block_rows = n_rows if n_rows <= r_target else r_target
    else:
        block_rows = min(block_rows, n_rows)
    if block_rows < n_rows:
        assert block_rows % 8 == 0, "row blocks must be multiples of 8 sublanes"

    n_blocks = _cdiv(n_rows, block_rows)
    chunk_rows = min(_CHUNK_ROWS, block_rows)
    # Second parallel axis so both v7x TensorCores have work even when N == 1.
    splits = 2 if (n_blocks >= 2 and n_blocks % 2 == 0) else 1
    bps = n_blocks // splits
    needs_mask = (n_blocks * block_rows * LANE != hw)

    kernel = functools.partial(
        _dice_sums_kernel, labels_mode=labels_mode, block_rows=block_rows,
        chunk_rows=chunk_rows, blocks_per_split=bps, n_blocks_total=n_blocks,
        hw=hw, needs_mask=needs_mask)

    p_spec = pl.BlockSpec((1, C, block_rows, LANE),
                          lambda n, s, j: (n, 0, s * bps + j, 0))
    if labels_mode:
        t_spec = pl.BlockSpec((1, block_rows, LANE),
                              lambda n, s, j: (n, s * bps + j, 0))
    else:
        t_spec = pl.BlockSpec((1, C, block_rows, LANE),
                              lambda n, s, j: (n, 0, s * bps + j, 0))

    partials = pl.pallas_call(
        kernel,
        out_shape=jax.ShapeDtypeStruct((N, splits, 3, C, LANE), jnp.float32),
        grid=(N, splits, bps),
        in_specs=[p_spec, t_spec],
        out_specs=pl.BlockSpec((1, 1, 3, C, LANE),
                               lambda n, s, j: (n, s, 0, 0, 0)),
        compiler_params=pltpu.CompilerParams(
            dimension_semantics=("parallel", "parallel", "arbitrary"),
            vmem_limit_bytes=32 * 1024 * 1024),
    )(p4, t4)

    # Tiny final reduction (batch, splits and the 128 lanes) in plain JAX.
    return jnp.sum(partials, axis=(0, 1, 4))            # (3, C)


def multi_dice_loss(predictive, target, smooth=1e-6, reduction="mean", *,
                    block_rows=None):
    """predictive: (N, C, H, W) logits (f32 or bf16).
    target: (N, C, H, W) one-hot (any dtype) OR (N, H, W) integer label map.
    Returns the scalar loss (f32)."""
    assert predictive.shape[0] == target.shape[0], \
        "predict & target batch size don't match"
    C = predictive.shape[1]

    sums = _dice_channel_sums(predictive, target, block_rows=block_rows)
    sum_pred, sum_tgt, sum_prod = sums[0], sums[1], sums[2]       # each (C,)

    dice = 1.0 - (2.0 * sum_prod + smooth) / (sum_pred + sum_tgt + smooth)
    all_loss = jnp.sum(dice[1:])   # skip background channel 0 (as in reference)
    loss = all_loss / C            # divide by C incl. background, as in reference

    if reduction == "mean":
        return jnp.mean(loss)
    elif reduction == "sum":
        return jnp.sum(loss)
    elif reduction == "none":
        return loss
    else:
        raise Exception("Unexpected reduction {}".format(reduction))


def _reference_loss(predictive, target, smooth=1e-6):
    """Pure-JAX reference of the PyTorch forward, for verification."""
    C = predictive.shape[1]
    sm = jax.nn.softmax(predictive.astype(jnp.float32), axis=1)
    all_loss = 0.0
    for i in range(1, C):
        p = sm[:, i].reshape(-1)
        t = target[:, i].reshape(-1).astype(jnp.float32)
        num = 2.0 * jnp.sum(p * t) + smooth
        den = jnp.sum(p) + jnp.sum(t) + smooth
        all_loss = all_loss + (1.0 - num / den)
    return all_loss / C


if __name__ == "__main__":
    key = jax.random.PRNGKey(0)

    def one_hot(lbl, c):
        return jax.nn.one_hot(lbl, c, axis=1, dtype=jnp.float32)

    checks = []

    # 1) Module-spec shapes; both the one-hot target path (PyTorch API parity)
    #    and the optimized integer-label path.
    k1, k2 = jax.random.split(key)
    N, C, H, W = 2, 4, 16, 16
    pred = jax.random.normal(k1, (N, C, H, W), dtype=jnp.float32)
    labels = jax.random.randint(k2, (N, H, W), 0, C)              # int32
    tgt = one_hot(labels, C)
    ref = _reference_loss(pred, tgt)
    checks.append((multi_dice_loss(pred, tgt), ref))
    checks.append((multi_dice_loss(pred, labels), ref))

    # 2) Multiple row-blocks + megacore "split" axis (block_rows override keeps
    #    shapes small), label-map path.
    k3, k4 = jax.random.split(k1)
    pred2 = jax.random.normal(k3, (1, 4, 32, 64), dtype=jnp.float32)
    lab2 = jax.random.randint(k4, (1, 32, 64), 0, 4)
    ref2 = _reference_loss(pred2, one_hot(lab2, 4))
    checks.append((multi_dice_loss(pred2, lab2, block_rows=8), ref2))

    # 3) Partial last row-block (stale-row sanitize + mask), one-hot path.
    k5, k6 = jax.random.split(k3)
    pred3 = jax.random.normal(k5, (1, 4, 32, 72), dtype=jnp.float32)
    tgt3 = one_hot(jax.random.randint(k6, (1, 32, 72), 0, 4), 4)
    ref3 = _reference_loss(pred3, tgt3)
    checks.append((multi_dice_loss(pred3, tgt3, block_rows=8), ref3))

    # 4) Ragged H*W (pad + lane mask), label-map path, odd channel count.
    k7, k8 = jax.random.split(k5)
    pred4 = jax.random.normal(k7, (2, 3, 10, 13), dtype=jnp.float32)
    lab4 = jax.random.randint(k8, (2, 10, 13), 0, 3)
    ref4 = _reference_loss(pred4, one_hot(lab4, 3))
    checks.append((multi_dice_loss(pred4, lab4), ref4))

    for got, want in checks:
        got = jax.block_until_ready(got)
        want = jax.block_until_ready(want)
        assert jnp.allclose(got, want, atol=1e-4, rtol=1e-4), (got, want)

    print("KERNEL_OK")
</pallas_src>

<mosaic_0001>
module attributes {stable_mosaic.version = 11 : i64} {
  func.func @_dice_sums_kernel(%arg0: i32, %arg1: i32, %arg2: i32, %arg3: memref<1x4x2x128xf32, #tpu.memory_space<vmem>>, %arg4: memref<1x4x2x128xf32, #tpu.memory_space<vmem>>, %arg5: memref<1x1x3x4x128xf32, #tpu.memory_space<vmem>>) attributes {dimension_semantics = [#tpu.dimension_semantics<parallel>, #tpu.dimension_semantics<parallel>, #tpu.dimension_semantics<arbitrary>], iteration_bounds = array<i64: 2, 1, 1>, scalar_prefetch = 0 : i64, scratch_operands = 0 : i64, tpu.core_type = #tpu.core_type<tc>, window_params = [{transform_indices = @transform_0, window_bounds = array<i64: 1, 4, 2, 128>}, {transform_indices = @transform_1, window_bounds = array<i64: 1, 4, 2, 128>}, {transform_indices = @transform_2, window_bounds = array<i64: 1, 1, 3, 4, 128>}]} {
    %c0_i32 = arith.constant 0 : i32
    %0 = arith.cmpi eq, %arg2, %c0_i32 : i32
    %1 = arith.extui %0 : i1 to i32
    %c0_i32_0 = arith.constant 0 : i32
    %2 = arith.cmpi ne, %1, %c0_i32_0 : i32
    scf.if %2 {
      %cst_44 = arith.constant 0.000000e+00 : f32
      %49 = vector.broadcast %cst_44 : f32 to vector<1x1x3x4x128xf32>
      %c0_45 = arith.constant 0 : index
      %c0_46 = arith.constant 0 : index
      %c0_47 = arith.constant 0 : index
      %c0_48 = arith.constant 0 : index
      %c0_49 = arith.constant 0 : index
      %50 = vector.load %arg5[%c0_45, %c0_46, %c0_47, %c0_48, %c0_49] : memref<1x1x3x4x128xf32, #tpu.memory_space<vmem>>, vector<1x1x3x4x128xf32>
      tpu.vector_store %arg5[%c0_45, %c0_46, %c0_47, %c0_48, %c0_49], %49 {strides = array<i32>} : memref<1x1x3x4x128xf32, #tpu.memory_space<vmem>>, vector<1x1x3x4x128xf32>,
    } else {
    }
    %cst = arith.constant 0.000000e+00 : f32
    %3 = vector.broadcast %cst : f32 to vector<4x128xf32>
    %cst_1 = arith.constant 0.000000e+00 : f32
    %4 = vector.broadcast %cst_1 : f32 to vector<4x128xf32>
    %cst_2 = arith.constant 0.000000e+00 : f32
    %5 = vector.broadcast %cst_2 : f32 to vector<4x128xf32>
    %c0 = arith.constant 0 : index
    %c0_3 = arith.constant 0 : index
    %c0_4 = arith.constant 0 : index
    %c0_5 = arith.constant 0 : index
    %6 = vector.load %arg3[%c0, %c0_3, %c0_4, %c0_5] : memref<1x4x2x128xf32, #tpu.memory_space<vmem>>, vector<1x4x2x128xf32>
    %7 = vector.shape_cast %6 : vector<1x4x2x128xf32> to vector<4x2x128xf32>
    %cst_6 = arith.constant dense<0xFF800000> : vector<2x128xf32>
    %8 = vector.multi_reduction <maximumf>, %7, %cst_6 [0] : vector<4x2x128xf32> to vector<2x128xf32>
    %9 = vector.shape_cast %8 : vector<2x128xf32> to vector<1x2x128xf32>
    %10 = vector.broadcast %9 : vector<1x2x128xf32> to vector<4x2x128xf32>
    %11 = arith.subf %7, %10 : vector<4x2x128xf32>
    %12 = math.exp %11 : vector<4x2x128xf32>
    %cst_7 = arith.constant dense<0.000000e+00> : vector<2x128xf32>
    %13 = vector.multi_reduction <add>, %12, %cst_7 [0] : vector<4x2x128xf32> to vector<2x128xf32>
    %14 = vector.shape_cast %13 : vector<2x128xf32> to vector<1x2x128xf32>
    %15 = tpu.reciprocal %14 {approx = true} : vector<1x2x128xf32> -> vector<1x2x128xf32>
    %16 = arith.mulf %14, %15 : vector<1x2x128xf32>
    %cst_8 = arith.constant 2.000000e+00 : f32
    %17 = vector.broadcast %cst_8 : f32 to vector<1x2x128xf32>
    %18 = arith.subf %17, %16 : vector<1x2x128xf32>
    %19 = arith.mulf %15, %18 : vector<1x2x128xf32>
    %20 = vector.broadcast %19 : vector<1x2x128xf32> to vector<4x2x128xf32>
    %21 = arith.mulf %12, %20 : vector<4x2x128xf32>
    %c0_9 = arith.constant 0 : index
    %c0_10 = arith.constant 0 : index
    %c0_11 = arith.constant 0 : index
    %c0_12 = arith.constant 0 : index
    %22 = vector.load %arg4[%c0_9, %c0_10, %c0_11, %c0_12] : memref<1x4x2x128xf32, #tpu.memory_space<vmem>>, vector<1x4x2x128xf32>
    %23 = vector.shape_cast %22 : vector<1x4x2x128xf32> to vector<4x2x128xf32>
    %cst_13 = arith.constant dense<0.000000e+00> : vector<4x128xf32>
    %24 = vector.multi_reduction <add>, %21, %cst_13 [1] : vector<4x2x128xf32> to vector<4x128xf32>
    %25 = arith.addf %3, %24 : vector<4x128xf32>
    %cst_14 = arith.constant dense<0.000000e+00> : vector<4x128xf32>
    %26 = vector.multi_reduction <add>, %23, %cst_14 [1] : vector<4x2x128xf32> to vector<4x128xf32>
    %27 = arith.addf %4, %26 : vector<4x128xf32>
    %28 = arith.mulf %21, %23 : vector<4x2x128xf32>
    %cst_15 = arith.constant dense<0.000000e+00> : vector<4x128xf32>
    %29 = vector.multi_reduction <add>, %28, %cst_15 [1] : vector<4x2x128xf32> to vector<4x128xf32>
    %30 = arith.addf %5, %29 : vector<4x128xf32>
    %c0_16 = arith.constant 0 : index
    %c0_17 = arith.constant 0 : index
    %c0_18 = arith.constant 0 : index
    %c0_19 = arith.constant 0 : index
    %c0_20 = arith.constant 0 : index
    %31 = vector.load %arg5[%c0_16, %c0_17, %c0_18, %c0_19, %c0_20] : memref<1x1x3x4x128xf32, #tpu.memory_space<vmem>>, vector<1x1x1x4x128xf32>
    %32 = vector.shape_cast %31 : vector<1x1x1x4x128xf32> to vector<4x128xf32>
    %33 = arith.addf %32, %25 : vector<4x128xf32>
    %c0_21 = arith.constant 0 : index
    %c0_22 = arith.constant 0 : index
    %c0_23 = arith.constant 0 : index
    %c0_24 = arith.constant 0 : index
    %c0_25 = arith.constant 0 : index
    %34 = vector.load %arg5[%c0_21, %c0_22, %c0_23, %c0_24, %c0_25] : memref<1x1x3x4x128xf32, #tpu.memory_space<vmem>>, vector<1x1x1x4x128xf32>
    %35 = vector.shape_cast %34 : vector<1x1x1x4x128xf32> to vector<4x128xf32>
    %36 = vector.shape_cast %33 : vector<4x128xf32> to vector<1x1x1x4x128xf32>
    tpu.vector_store %arg5[%c0_21, %c0_22, %c0_23, %c0_24, %c0_25], %36 {strides = array<i32>} : memref<1x1x3x4x128xf32, #tpu.memory_space<vmem>>, vector<1x1x1x4x128xf32>,
    %c0_26 = arith.constant 0 : index
    %c0_27 = arith.constant 0 : index
    %c1 = arith.constant 1 : index
    %c0_28 = arith.constant 0 : index
    %c0_29 = arith.constant 0 : index
    %37 = vector.load %arg5[%c0_26, %c0_27, %c1, %c0_28, %c0_29] : memref<1x1x3x4x128xf32, #tpu.memory_space<vmem>>, vector<1x1x1x4x128xf32>
    %38 = vector.shape_cast %37 : vector<1x1x1x4x128xf32> to vector<4x128xf32>
    %39 = arith.addf %38, %27 : vector<4x128xf32>
    %c0_30 = arith.constant 0 : index
    %c0_31 = arith.constant 0 : index
    %c1_32 = arith.constant 1 : index
    %c0_33 = arith.constant 0 : index
    %c0_34 = arith.constant 0 : index
    %40 = vector.load %arg5[%c0_30, %c0_31, %c1_32, %c0_33, %c0_34] : memref<1x1x3x4x128xf32, #tpu.memory_space<vmem>>, vector<1x1x1x4x128xf32>
    %41 = vector.shape_cast %40 : vector<1x1x1x4x128xf32> to vector<4x128xf32>
    %42 = vector.shape_cast %39 : vector<4x128xf32> to vector<1x1x1x4x128xf32>
    tpu.vector_store %arg5[%c0_30, %c0_31, %c1_32, %c0_33, %c0_34], %42 {strides = array<i32>} : memref<1x1x3x4x128xf32, #tpu.memory_space<vmem>>, vector<1x1x1x4x128xf32>,
    %c0_35 = arith.constant 0 : index
    %c0_36 = arith.constant 0 : index
    %c2 = arith.constant 2 : index
    %c0_37 = arith.constant 0 : index
    %c0_38 = arith.constant 0 : index
    %43 = vector.load %arg5[%c0_35, %c0_36, %c2, %c0_37, %c0_38] : memref<1x1x3x4x128xf32, #tpu.memory_space<vmem>>, vector<1x1x1x4x128xf32>
    %44 = vector.shape_cast %43 : vector<1x1x1x4x128xf32> to vector<4x128xf32>
    %45 = arith.addf %44, %30 : vector<4x128xf32>
    %c0_39 = arith.constant 0 : index
    %c0_40 = arith.constant 0 : index
    %c2_41 = arith.constant 2 : index
    %c0_42 = arith.constant 0 : index
    %c0_43 = arith.constant 0 : index
    %46 = vector.load %arg5[%c0_39, %c0_40, %c2_41, %c0_42, %c0_43] : memref<1x1x3x4x128xf32, #tpu.memory_space<vmem>>, vector<1x1x1x4x128xf32>
    %47 = vector.shape_cast %46 : vector<1x1x1x4x128xf32> to vector<4x128xf32>
    %48 = vector.shape_cast %45 : vector<4x128xf32> to vector<1x1x1x4x128xf32>
    tpu.vector_store %arg5[%c0_39, %c0_40, %c2_41, %c0_42, %c0_43], %48 {strides = array<i32>} : memref<1x1x3x4x128xf32, #tpu.memory_space<vmem>>, vector<1x1x1x4x128xf32>,
    return
  }
  func.func @transform_0(%arg0: i32, %arg1: i32, %arg2: i32) -> (i32, i32, i32, i32) {
    %c1_i32 = arith.constant 1 : i32
    %0 = arith.muli %arg1, %c1_i32 : i32
    %1 = arith.addi %0, %arg2 : i32
    %c0_i32 = arith.constant 0 : i32
    %c0_i32_0 = arith.constant 0 : i32
    %c0_i32_1 = arith.constant 0 : i32
    return %arg0, %c0_i32, %1, %c0_i32_0 : i32, i32, i32, i32
  }
  func.func @transform_1(%arg0: i32, %arg1: i32, %arg2: i32) -> (i32, i32, i32, i32) {
    %c1_i32 = arith.constant 1 : i32
    %0 = arith.muli %arg1, %c1_i32 : i32
    %1 = arith.addi %0, %arg2 : i32
    %c0_i32 = arith.constant 0 : i32
    %c0_i32_0 = arith.constant 0 : i32
    %c0_i32_1 = arith.constant 0 : i32
    return %arg0, %c0_i32, %1, %c0_i32_0 : i32, i32, i32, i32
  }
  func.func @transform_2(%arg0: i32, %arg1: i32, %arg2: i32) -> (i32, i32, i32, i32, i32) {
    %c0_i32 = arith.constant 0 : i32
    %c0_i32_0 = arith.constant 0 : i32
    %c0_i32_1 = arith.constant 0 : i32
    %c0_i32_2 = arith.constant 0 : i32
    return %arg0, %arg1, %c0_i32, %c0_i32_0, %c0_i32_1 : i32, i32, i32, i32, i32
  }
}

</mosaic_0001>

<llo_original>
// kernel: tpu_custom_call.1
$region0: #{tpu_custom_call.1}
  #allocation0 [shape = 'u32[]', space=smem, size = 0x4, offset = 0x4, fixed_abs, tag = 'smem constant byte address 0x4 - core index']
  #allocation1 [shape = 'u32[144,128]{1,0:T(1,128)}', space=vmem, size = 0x12000, scoped, tag = 'internal scratch']
  %s0 = inlined_call_operand.hbm [shape: f32[2,4,2,128], index: 0, kind: input, shape index: {}]
  %s1 = inlined_call_operand.hbm [shape: f32[2,4,2,128], index: 1, kind: input, shape index: {}]
  %s2 = inlined_call_operand.hbm [shape: f32[2,1,3,4,128], index: 2, kind: output, shape index: {}]
  %s3 = sld [smem:[#allocation0]]
  $region53: #{tpu_custom_call.1} parent=0
    _
  %s5 = ssub.s32 1, %s3
  %s6 = scalar_select 0, %s5, %s3
  $region1: #{tpu_custom_call.1} parent=0
    #allocation2 [shape = 'u8[8192]{0}', space=vmem, size = 0x2000, scoped, tag = 'input window, operand 0']
    #allocation3 [shape = 's32[2]{0}', space=sflag, size = 0x8, scoped, tag = 'scoped memory for tpu_custom_call.1']
    #allocation4 [shape = 's32[2]{0}', space=sflag, size = 0x8, scoped, tag = 'scoped memory for tpu_custom_call.1']
    #allocation5 [shape = 'u8[8192]{0}', space=vmem, size = 0x2000, scoped, tag = 'input window, operand 1']
    #allocation6 [shape = 's32[2]{0}', space=sflag, size = 0x8, scoped, tag = 'scoped memory for tpu_custom_call.1']
    #allocation7 [shape = 'u8[12288]{0}', space=vmem, size = 0x3000, scoped, tag = 'output window, operand 0']
    %7 = vsyncpa [#allocation3], 0
    %s8 = scalar_lea.sflag [#allocation3], 1
    %9 = vsyncpa %s8, 0
    %10 = vsyncpa [#allocation6], 0
    %s11 = scalar_lea.sflag [#allocation6], 1
    %12 = vsyncpa %s11, 0
    %13 = vsyncpa [#allocation4], 0
    %s14 = scalar_lea.sflag [#allocation4], 1
    %15 = vsyncpa %s14, 0
    loop: start=0, step=1, limit=4
    $region2: #{tpu_custom_call.1} parent=1 // loop_pre_header
      _
    $region3: #{tpu_custom_call.1} parent=1 // loop_header
      %s17 = sphi 0, %s21
      %p18 = scmp.ge.s32.totalorder %s17, 4
      %s24 = sphi 0, %s43
      %s25 = sphi 0, %s39
      %s26 = sphi 0, %s35
      %s27 = sphi 0, %s24
      %s28 = sphi 0, %s25
      %s29 = sphi 0, %s26
      %s30 = sphi 0, %s27
      %s31 = sphi 0, %s28
      %s32 = sphi 0, %s29
      %s50 = sphi 0, %s52
      %s53 = sphi 0, %s50
      %s54 = sphi 0, %s53
      %s70 = sphi 0, %s54
      %s80 = sphi 0, %s82
      %s83 = sphi 0, %s80
      %s84 = sphi 0, %s83
      %s100 = sphi 0, %s84
      %s108 = sphi 0, %s110
      %s111 = sphi 0, %s108
      %s112 = sphi 0, %s111
      %s128 = sphi 0, %s112
    $region4: #{tpu_custom_call.1} parent=1 // loop_header_branch
      %20 = sbr.rel (%p18) target = $region8
    $region5: #{tpu_custom_call.1} parent=1 // loop_body
      %s22 = ssub.s32 %s17, 1
      %s23 = ssub.s32 %s17, 2
      %s33 = sadd.s32 1, %s26
      %p34 = scmp.ge.s32.totalorder %s33, 1
      %s35 = scalar_select %p34, 0, %s33
      %s36 = sadd.s32 1, %s25
      %s37 = scalar_select %p34, %s36, %s25
      %p38 = scmp.ge.s32.totalorder %s37, 1
      %s39 = scalar_select %p38, 0, %s37
      %s40 = sadd.s32 1, %s24
      %s41 = scalar_select %p38, %s40, %s24
      %p42 = scmp.ge.s32.totalorder %s41, 2
      %s43 = scalar_select %p42, 0, %s41
      %s44 = sadd.s32 %s25, %s26
      %s45 = sadd.s32 %s39, %s35
      %s46 = ssub.s32 %s24, %s43
      %s47 = ssub.s32 %s44, %s45
      %s48 = sor.u32 %s46, %s47
      %p49 = scmp.eq.s32.totalorder %s48, 0
      %s51 = sadd.s32 %s50, 1
      %s52 = scalar_select %p49, %s50, %s51
      %p55 = pneg %p49
      %p56 = scmp.eq.s32.totalorder %s17, 1
      %p57 = por %p55, %p56
      %p58 = scmp.ne.s32.totalorder %s50, %s53
      %p59 = scmp.eq.s32.totalorder %s17, 0
      %p60 = por %p58, %p59
      %p61 = scmp.ne.s32.totalorder %s50, %s53
      %p62 = scmp.eq.s32.totalorder %s22, 1
      %p63 = por %p61, %p62
      %p64 = scmp.ne.s32.totalorder %s53, %s54
      %p65 = scmp.eq.s32.totalorder %s22, 0
      %p66 = por %p64, %p65
      %p67 = scmp.ne.s32.totalorder %s53, %s54
      %p68 = scmp.eq.s32.totalorder %s23, 1
      %p69 = por %p67, %p68
      %p71 = scmp.ne.s32.totalorder %s54, %s70
      %p72 = scmp.eq.s32.totalorder %s23, 0
      %p73 = por %p71, %p72
      %s74 = sadd.s32 %s25, %s26
      %s75 = sadd.s32 %s39, %s35
      %s76 = ssub.s32 %s24, %s43
      %s77 = ssub.s32 %s74, %s75
      %s78 = sor.u32 %s76, %s77
      %p79 = scmp.eq.s32.totalorder %s78, 0
      %s81 = sadd.s32 %s80, 1
      %s82 = scalar_select %p79, %s80, %s81
      %p85 = pneg %p79
      %p86 = scmp.eq.s32.totalorder %s17, 1
      %p87 = por %p85, %p86
      %p88 = scmp.ne.s32.totalorder %s80, %s83
      %p89 = scmp.eq.s32.totalorder %s17, 0
      %p90 = por %p88, %p89
      %p91 = scmp.ne.s32.totalorder %s80, %s83
      %p92 = scmp.eq.s32.totalorder %s22, 1
      %p93 = por %p91, %p92
      %p94 = scmp.ne.s32.totalorder %s83, %s84
      %p95 = scmp.eq.s32.totalorder %s22, 0
      %p96 = por %p94, %p95
      %p97 = scmp.ne.s32.totalorder %s83, %s84
      %p98 = scmp.eq.s32.totalorder %s23, 1
      %p99 = por %p97, %p98
      %p101 = scmp.ne.s32.totalorder %s84, %s100
      %p102 = scmp.eq.s32.totalorder %s23, 0
      %p103 = por %p101, %p102
      %s104 = ssub.s32 %s24, %s43
      %s105 = ssub.s32 %s25, %s39
      %s106 = sor.u32 %s104, %s105
      %p107 = scmp.eq.s32.totalorder %s106, 0
      %s109 = sadd.s32 %s108, 1
      %s110 = scalar_select %p107, %s108, %s109
      %p113 = pneg %p107
      %p114 = scmp.eq.s32.totalorder %s17, 1
      %p115 = por %p113, %p114
      %p116 = scmp.ne.s32.totalorder %s108, %s111
      %p117 = scmp.eq.s32.totalorder %s17, 0
      %p118 = por %p116, %p117
      %p119 = scmp.ne.s32.totalorder %s108, %s111
      %p120 = scmp.eq.s32.totalorder %s22, 1
      %p121 = por %p119, %p120
      %p122 = scmp.ne.s32.totalorder %s111, %s112
      %p123 = scmp.eq.s32.totalorder %s22, 0
      %p124 = por %p122, %p123
      %p125 = scmp.ne.s32.totalorder %s111, %s112
      %p126 = scmp.eq.s32.totalorder %s23, 1
      %p127 = por %p125, %p126
      %p129 = scmp.ne.s32.totalorder %s112, %s128
      %p130 = scmp.eq.s32.totalorder %s23, 0
      %p131 = por %p129, %p130
      %p132 = scmp.le.s32.totalorder 1, %s17
      %p133 = scmp.lt.s32.totalorder %s17, 3
      %p134 = pnand %p132, %p133
      %p135 = pneg %p134
      // Predicated region
      $region9: #{tpu_custom_call.1} parent=5 // pred_check
        _
      $region10: #{tpu_custom_call.1} parent=5 // pred_check_branch
        %137 = sbr.rel (%p134) target = $region12
      $region11: #{tpu_custom_call.1} parent=5 // pred_region
        %s138 = ssub.s32 %s17, 1
      $region12: #{tpu_custom_call.1} parent=5 // pred_fallthru
        _
      %p139 = scmp.lt.s32.totalorder %s17, 2
      // Predicated region
      $region13: #{tpu_custom_call.1} parent=5 // pred_check
        %p140 = pneg %p139
      $region14: #{tpu_custom_call.1} parent=5 // pred_check_branch
        %142 = sbr.rel (%p140) target = $region16
      $region15: #{tpu_custom_call.1} parent=5 // pred_region
        // Predicated region
        $region17: #{tpu_custom_call.1} parent=15 // pred_check
          %p143 = pneg %p60
        $region18: #{tpu_custom_call.1} parent=15 // pred_check_branch
          %145 = sbr.rel (%p143) target = $region20
        $region19: #{tpu_custom_call.1} parent=15 // pred_region
          %s146 = sand.u32 %s50, 1
          %s147 = scalar_lea.sflag [#allocation3], %s146
          %s148 = sand.u32 %s50, 1
          %s149 = smul.addr %s148, 8
          %s150 = scalar_lea.vmem [#allocation2], %s149
          %s151 = sadd.s32 %s25, %s26
          %s153 = ssub.s32 128, 128
          %154 = vsyncadd %s147, %s153
          %s155 = smul.addr %s24, 4
          %s156 = sadd.s32 %s151, %s155
          %s157 = smul.addr %s156, 32
          %s158 = scalar_lea.hbm %s0, %s157
          %s159 = sshll.u32 %s150, 4
          %s160 = int_to_ptr.vmem [resolvable:$true] %s159
          %165 = dma.hbm_to_vmem [thread:$0]  %s158, 128, %s160, %s147, 32, 32, 2
        $region20: #{tpu_custom_call.1} parent=15 // pred_fallthru
          _
        // Predicated region
        $region21: #{tpu_custom_call.1} parent=15 // pred_check
          %p166 = pneg %p90
        $region22: #{tpu_custom_call.1} parent=15 // pred_check_branch
          %168 = sbr.rel (%p166) target = $region24
        $region23: #{tpu_custom_call.1} parent=15 // pred_region
          %s169 = sand.u32 %s80, 1
          %s170 = scalar_lea.sflag [#allocation6], %s169
          %s171 = sand.u32 %s80, 1
          %s172 = smul.addr %s171, 8
          %s173 = scalar_lea.vmem [#allocation5], %s172
          %s174 = sadd.s32 %s25, %s26
          %s176 = ssub.s32 128, 128
          %177 = vsyncadd %s170, %s176
          %s178 = smul.addr %s24, 4
          %s179 = sadd.s32 %s174, %s178
          %s180 = smul.addr %s179, 32
          %s181 = scalar_lea.hbm %s1, %s180
          %s182 = sshll.u32 %s173, 4
          %s183 = int_to_ptr.vmem [resolvable:$true] %s182
          %188 = dma.hbm_to_vmem [thread:$0]  %s181, 128, %s183, %s170, 32, 32, 2
        $region24: #{tpu_custom_call.1} parent=15 // pred_fallthru
          _
      $region16: #{tpu_custom_call.1} parent=5 // pred_fallthru
        _
      %p189 = scmp.le.s32.totalorder 1, %s17
      %p190 = scmp.lt.s32.totalorder %s17, 3
      %p191 = pnand %p189, %p190
      %p192 = pneg %p191
      // Predicated region
      $region25: #{tpu_custom_call.1} parent=5 // pred_check
        _
      $region26: #{tpu_custom_call.1} parent=5 // pred_check_branch
        %194 = sbr.rel (%p191) target = $region28
      $region27: #{tpu_custom_call.1} parent=5 // pred_region
        %s195 = ssub.s32 %s17, 1
        %s196 = sand.u32 %s53, 1
        %s197 = scalar_lea.sflag [#allocation3], %s196
        %s198 = sand.u32 %s53, 1
        %s199 = smul.addr %s198, 8
        %s200 = scalar_lea.vmem [#allocation2], %s199
        // Predicated region
        $region29: #{tpu_custom_call.1} parent=27 // pred_check
          %p201 = pneg %p66
        $region30: #{tpu_custom_call.1} parent=27 // pred_check_branch
          %203 = sbr.rel (%p201) target = $region32
        $region31: #{tpu_custom_call.1} parent=27 // pred_region
          %204 = dma.done %s197, 128
        $region32: #{tpu_custom_call.1} parent=27 // pred_fallthru
          _
        %s205 = sand.u32 %s83, 1
        %s206 = scalar_lea.sflag [#allocation6], %s205
        %s207 = sand.u32 %s83, 1
        %s208 = smul.addr %s207, 8
        %s209 = scalar_lea.vmem [#allocation5], %s208
        // Predicated region
        $region33: #{tpu_custom_call.1} parent=27 // pred_check
          %p210 = pneg %p96
        $region34: #{tpu_custom_call.1} parent=27 // pred_check_branch
          %212 = sbr.rel (%p210) target = $region36
        $region35: #{tpu_custom_call.1} parent=27 // pred_region
          %213 = dma.done %s206, 128
        $region36: #{tpu_custom_call.1} parent=27 // pred_fallthru
          _
        %s214 = sand.u32 %s53, 1
        %s215 = scalar_lea.sflag [#allocation3], %s214
        %s216 = sand.u32 %s53, 1
        %s217 = smul.addr %s216, 8
        %s218 = scalar_lea.vmem [#allocation2], %s217
        %p219 = pneg %p66
        %p220 = pneg %p63
        %s221 = sand.u32 %s83, 1
        %s222 = scalar_lea.sflag [#allocation6], %s221
        %s223 = sand.u32 %s83, 1
        %s224 = smul.addr %s223, 8
        %s225 = scalar_lea.vmem [#allocation5], %s224
        %p226 = pneg %p96
        %p227 = pneg %p93
        %p228 = pneg %p124
        %p229 = pneg %p121
        %s230 = sand.u32 %s111, 1
        %s231 = scalar_lea.sflag [#allocation4], %s230
        %s232 = sand.u32 %s111, 1
        %s233 = smul.addr %s232, 12
        %s234 = scalar_lea.vmem [#allocation7], %s233
        %s235 = sadd.s32 %s28, %s29
        %s236 = sadd.s32 %s28, %s29
        %p237 = scmp.eq.s32.totalorder %s29, 0
        // Predicated region
        $region37: #{tpu_custom_call.1} parent=27 // pred_check
          %p238 = pneg %p237
        $region38: #{tpu_custom_call.1} parent=27 // pred_check_branch
          %240 = sbr.rel (%p238) target = $region40
        $region39: #{tpu_custom_call.1} parent=27 // pred_region
          %241 = vst [vmem:[%s234] sm:$0xf] 0.0
          %242 = vst [vmem:[%s234 + $0x4] sm:$0xf] 0.0
          %243 = vst [vmem:[%s234 + $0x8] sm:$0xf] 0.0
        $region40: #{tpu_custom_call.1} parent=27 // pred_fallthru
          _
        %v244 = vld [vmem:[%s200] sm:$0x3]
        %v245 = vld [vmem:[%s200 + $0x2] sm:$0x3]
        %v246 = vld [vmem:[%s200 + $0x4] sm:$0x3]
        %v247 = vld [vmem:[%s200 + $0x6] sm:$0x3]
        %vm248 = vcmask 1041408
        %v249 = vsel %vm248, %v244, -inf
        %v250 = vsel %vm248, %v245, -inf
        %v251 = vsel %vm248, %v246, -inf
        %v252 = vsel %vm248, %v247, -inf
        %v253 = vmax.f32 %v249, %v250
        %v254 = vmax.f32 %v251, %v252
        %v255 = vmax.f32 %v253, %v254
        %v256 = vsub.f32 %v244, %v255
        %v257 = vsub.f32 %v245, %v255
        %v258 = vsub.f32 %v246, %v255
        %v259 = vsub.f32 %v247, %v255
        %v260 = vmul.f32 %v256, 1.442695
        %v261 = vpow.pop %v260
        %v262 = vmul.f32 %v257, 1.442695
        %v263 = vpow.pop %v262
        %v264 = vmul.f32 %v258, 1.442695
        %v265 = vpow.pop %v264
        %v266 = vmul.f32 %v259, 1.442695
        %v267 = vpow.pop %v266
        %v268 = vsel %vm248, %v261, 0.0
        %v269 = vsel %vm248, %v263, 0.0
        %v270 = vadd.f32 %v268, %v269
        %v271 = vsel %vm248, %v265, 0.0
        %v272 = vadd.f32 %v270, %v271
        %v273 = vsel %vm248, %v267, 0.0
        %v274 = vadd.f32 %v272, %v273
        %v275 = vrcp.pop %v274
        %v276 = vmul.f32 %v274, %v275
        %v277 = vsub.f32 2.0, %v276
        %v278 = vmul.f32 %v275, %v277
        %v279 = vmul.f32 %v261, %v278
        %v280 = vmul.f32 %v263, %v278
        %v281 = vmul.f32 %v265, %v278
        %v282 = vmul.f32 %v267, %v278
        %v283 = vld [vmem:[%s209] sm:$0x3]
        %v284 = vld [vmem:[%s209 + $0x2] sm:$0x3]
        %v285 = vld [vmem:[%s209 + $0x4] sm:$0x3]
        %v286 = vld [vmem:[%s209 + $0x6] sm:$0x3]
        %v287 = vsel %vm248, %v279, 0.0
        %v288 = vrot.slane %v287, 4
        %v289 = vadd.f32 %v287, %v288
        %v290 = vrot.slane %v289, 2
        %v291 = vadd.f32 %v289, %v290
        %v292 = vrot.slane %v291, 1
        %v293 = vadd.f32 %v291, %v292
        %v294 = vsel %vm248, %v280, 0.0
        %v295 = vrot.slane %v294, 4
        %v296 = vadd.f32 %v294, %v295
        %v297 = vrot.slane %v296, 2
        %v298 = vadd.f32 %v296, %v297
        %v299 = vrot.slane %v298, 1
        %v300 = vadd.f32 %v298, %v299
        %v301 = vsel %vm248, %v281, 0.0
        %v302 = vrot.slane %v301, 4
        %v303 = vadd.f32 %v301, %v302
        %v304 = vrot.slane %v303, 2
        %v305 = vadd.f32 %v303, %v304
        %v306 = vrot.slane %v305, 1
        %v307 = vadd.f32 %v305, %v306
        %v308 = vsel %vm248, %v282, 0.0
        %v309 = vrot.slane %v308, 4
        %v310 = vadd.f32 %v308, %v309
        %v311 = vrot.slane %v310, 2
        %v312 = vadd.f32 %v310, %v311
        %v313 = vrot.slane %v312, 1
        %v314 = vadd.f32 %v312, %v313
        %v315 = vadd.f32 %v293, 0.0
        %v316 = vadd.f32 %v300, 0.0
        %v317 = vadd.f32 %v307, 0.0
        %v318 = vadd.f32 %v314, 0.0
        %v319 = vsel %vm248, %v283, 0.0
        %v320 = vrot.slane %v319, 4
        %v321 = vadd.f32 %v319, %v320
        %v322 = vrot.slane %v321, 2
        %v323 = vadd.f32 %v321, %v322
        %v324 = vrot.slane %v323, 1
        %v325 = vadd.f32 %v323, %v324
        %v326 = vsel %vm248, %v284, 0.0
        %v327 = vrot.slane %v326, 4
        %v328 = vadd.f32 %v326, %v327
        %v329 = vrot.slane %v328, 2
        %v330 = vadd.f32 %v328, %v329
        %v331 = vrot.slane %v330, 1
        %v332 = vadd.f32 %v330, %v331
        %v333 = vsel %vm248, %v285, 0.0
        %v334 = vrot.slane %v333, 4
        %v335 = vadd.f32 %v333, %v334
        %v336 = vrot.slane %v335, 2
        %v337 = vadd.f32 %v335, %v336
        %v338 = vrot.slane %v337, 1
        %v339 = vadd.f32 %v337, %v338
        %v340 = vsel %vm248, %v286, 0.0
        %v341 = vrot.slane %v340, 4
        %v342 = vadd.f32 %v340, %v341
        %v343 = vrot.slane %v342, 2
        %v344 = vadd.f32 %v342, %v343
        %v345 = vrot.slane %v344, 1
        %v346 = vadd.f32 %v344, %v345
        %v347 = vadd.f32 %v325, 0.0
        %v348 = vadd.f32 %v332, 0.0
        %v349 = vadd.f32 %v339, 0.0
        %v350 = vadd.f32 %v346, 0.0
        %v351 = vmul.f32 %v279, %v283
        %v352 = vmul.f32 %v280, %v284
        %v353 = vmul.f32 %v281, %v285
        %v354 = vmul.f32 %v282, %v286
        %v355 = vsel %vm248, %v351, 0.0
        %v356 = vrot.slane %v355, 4
        %v357 = vadd.f32 %v355, %v356
        %v358 = vrot.slane %v357, 2
        %v359 = vadd.f32 %v357, %v358
        %v360 = vrot.slane %v359, 1
        %v361 = vadd.f32 %v359, %v360
        %v362 = vsel %vm248, %v352, 0.0
        %v363 = vrot.slane %v362, 4
        %v364 = vadd.f32 %v362, %v363
        %v365 = vrot.slane %v364, 2
        %v366 = vadd.f32 %v364, %v365
        %v367 = vrot.slane %v366, 1
        %v368 = vadd.f32 %v366, %v367
        %v369 = vsel %vm248, %v353, 0.0
        %v370 = vrot.slane %v369, 4
        %v371 = vadd.f32 %v369, %v370
        %v372 = vrot.slane %v371, 2
        %v373 = vadd.f32 %v371, %v372
        %v374 = vrot.slane %v373, 1
        %v375 = vadd.f32 %v373, %v374
        %v376 = vsel %vm248, %v354, 0.0
        %v377 = vrot.slane %v376, 4
        %v378 = vadd.f32 %v376, %v377
        %v379 = vrot.slane %v378, 2
        %v380 = vadd.f32 %v378, %v379
        %v381 = vrot.slane %v380, 1
        %v382 = vadd.f32 %v380, %v381
        %v383 = vadd.f32 %v361, 0.0
        %v384 = vadd.f32 %v368, 0.0
        %v385 = vadd.f32 %v375, 0.0
        %v386 = vadd.f32 %v382, 0.0
        %v387 = vld [vmem:[%s234] sm:$0xf]
        %vm392 = vcmask 1041409
        %v393 = vsel %vm392, %v316, %v315
        %vm394 = vcmask 1042434
        %v395 = vsel %vm394, %v317, %v393
        %vm396 = vcmask 1043459
        %v397 = vsel %vm396, %v318, %v395
        %v399 = vadd.f32 %v387, %v397
        %400 = vst [vmem:[%s234] sm:$0xf] %v399
        %s401 = scalar_lea.vmem %s234, 4 [#allocation7]
        %v402 = vld [vmem:[%s401] sm:$0xf]
        %v407 = vsel %vm392, %v348, %v347
        %v408 = vsel %vm394, %v349, %v407
        %v409 = vsel %vm396, %v350, %v408
        %v411 = vadd.f32 %v402, %v409
        %412 = vst [vmem:[%s401] sm:$0xf] %v411
        %s413 = scalar_lea.vmem %s234, 8 [#allocation7]
        %v414 = vld [vmem:[%s413] sm:$0xf]
        %v419 = vsel %vm392, %v384, %v383
        %v420 = vsel %vm394, %v385, %v419
        %v421 = vsel %vm396, %v386, %v420
        %v423 = vadd.f32 %v414, %v421
        %424 = vst [vmem:[%s413] sm:$0xf] %v423
        %s425 = sand.u32 %s111, 1
        %s426 = scalar_lea.sflag [#allocation4], %s425
        %s427 = sand.u32 %s111, 1
        %s428 = smul.addr %s427, 12
        %s429 = scalar_lea.vmem [#allocation7], %s428
        // Predicated region
        $region41: #{tpu_custom_call.1} parent=27 // pred_check
          %p430 = pneg %p121
        $region42: #{tpu_custom_call.1} parent=27 // pred_check_branch
          %432 = sbr.rel (%p430) target = $region44
        $region43: #{tpu_custom_call.1} parent=27 // pred_region
          %s434 = ssub.s32 192, 192
          %435 = vsyncadd %s426, %s434
          %s436 = smul.addr %s28, 3
          %s437 = smul.addr %s27, 3
          %s438 = sadd.s32 %s436, %s437
          %s439 = smul.addr %s438, 64
          %s440 = scalar_lea.hbm %s2, %s439
          %s441 = sshll.u32 %s429, 4
          %s442 = int_to_ptr.vmem [resolvable:$true] %s441
          %447 = dma.vmem_to_hbm [thread:$0]  %s442, 192, %s440, %s426, 64, 64, 4
        $region44: #{tpu_custom_call.1} parent=27 // pred_fallthru
          _
      $region28: #{tpu_custom_call.1} parent=5 // pred_fallthru
        _
      %p448 = scmp.le.s32.totalorder 2, %s17
      // Predicated region
      $region45: #{tpu_custom_call.1} parent=5 // pred_check
        %p449 = pneg %p448
      $region46: #{tpu_custom_call.1} parent=5 // pred_check_branch
        %451 = sbr.rel (%p449) target = $region48
      $region47: #{tpu_custom_call.1} parent=5 // pred_region
        %s452 = ssub.s32 %s17, 2
        // Predicated region
        $region49: #{tpu_custom_call.1} parent=47 // pred_check
          %p453 = pneg %p127
        $region50: #{tpu_custom_call.1} parent=47 // pred_check_branch
          %455 = sbr.rel (%p453) target = $region52
        $region51: #{tpu_custom_call.1} parent=47 // pred_region
          %s456 = sand.u32 %s112, 1
          %s457 = scalar_lea.sflag [#allocation4], %s456
          %s458 = sand.u32 %s112, 1
          %s459 = smul.addr %s458, 12
          %s460 = scalar_lea.vmem [#allocation7], %s459
          %461 = dma.done %s457, 192
        $region52: #{tpu_custom_call.1} parent=47 // pred_fallthru
          _
      $region48: #{tpu_custom_call.1} parent=5 // pred_fallthru
        _
    $region6: #{tpu_custom_call.1} parent=1 // loop_footer
      %s21 = sadd.s32 1, %s17
    $region7: #{tpu_custom_call.1} parent=1 // loop_footer_branch
      %16 = sbr.rel target = $region3
    $region8: #{tpu_custom_call.1} parent=1 // loop_exit
      _
    %462 = vsyncpa [#allocation3], 1
    %s463 = scalar_lea.sflag [#allocation3], 1
    %464 = vsyncpa %s463, 1
    %465 = vsyncpa [#allocation6], 1
    %s466 = scalar_lea.sflag [#allocation6], 1
    %467 = vsyncpa %s466, 1
    %468 = vsyncpa [#allocation4], 1
    %s469 = scalar_lea.sflag [#allocation4], 1
    %470 = vsyncpa %s469, 1

</llo_original>
